<compile_context>
chip_gen: v7x
topology: tpu7x:2x2x1
jax: 0.10.0
libtpu: 0.0.40
codegen_flags: <defaults>
</compile_context>

<pallas_src>
import functools

import jax
import jax.numpy as jnp
from jax import lax
from jax.experimental import pallas as pl
from jax.experimental.pallas import tpu as pltpu

_CLIP_DEN = 1e-8                 # torch .clip(1e-8) on the denominator
_CLIP_INV = 1.0 / _CLIP_DEN      # equivalent clip on the inverse (1e8)


# ---------------------------------------------------------------------------
# Chip / tiling budgets (trace-time, pure python)
# ---------------------------------------------------------------------------
@functools.lru_cache(maxsize=None)
def _chip_budget():
    """Generation-aware VMEM budgets (bytes)."""
    vmem_phys = 64 << 20                      # conservative default (v7x per-TC VMEM)
    try:
        info = pltpu.get_tpu_info()
        vmem_phys = int(getattr(info, "vmem_capacity_bytes", vmem_phys)) or vmem_phys
    except Exception:
        pass
    if vmem_phys >= (100 << 20):
        # v5e / v6e: 128 MiB VMEM
        return {"vmem_cap": 112 << 20, "full_row_tile": 16 << 20,
                "b_tile_target": 8 << 20, "t_tile_target": 4 << 20}
    # v7x: 64 MiB physical VMEM per TensorCore
    return {"vmem_cap": 56 << 20, "full_row_tile": 8 << 20,
            "b_tile_target": 6 << 20, "t_tile_target": 4 << 20}


def _row_align(itemsize):
    # native sublane packing: 8 rows for f32, 16 for bf16, 32 for int8
    return 8 * max(1, 4 // int(itemsize))


def _pick_b_tiling(B, T, itemsize, budget):
    """Rows per block for the single-pass (full-T rows) path."""
    row_align = _row_align(itemsize)
    if B <= row_align:
        return B                                   # full-extent rows block (grid_b == 1)
    row_f32_bytes = T * 4
    b_ceil = -(-B // row_align) * row_align
    rows_target = max(row_align,
                      (budget["b_tile_target"] // max(row_f32_bytes, 1))
                      // row_align * row_align)
    rows_2 = max(row_align, (b_ceil // 2) // row_align * row_align)   # >= 2 grid steps
    rows = min(rows_target, rows_2)
    rows_4 = max(row_align, (b_ceil // 4) // row_align * row_align)   # prefer 4 steps
    if rows_4 * row_f32_bytes >= (2 << 20):                            # ...if tiles stay >= 2 MiB
        rows = min(rows, rows_4)
    return rows


def _pick_t_tiling(T, block_b, budget):
    """T-block (multiple of 128) for the two-pass path."""
    target = max(128, (budget["t_tile_target"] // max(block_b * 4, 1)) // 128 * 128)
    t_ceil = -(-T // 128) * 128
    target = min(target, t_ceil)
    if T % 128 == 0:
        # prefer a 128-multiple divisor of T near the target -> no ragged tail to mask
        t128 = T // 128
        for cand in range(target // 128, 0, -1):
            if t128 % cand == 0:
                bt = cand * 128
                if bt * 2 >= target:
                    return bt
                break
    return target


# ---------------------------------------------------------------------------
# Kernels
# ---------------------------------------------------------------------------
def _scale_rows_kernel(wav_ref, out_ref, *, mode):
    """Single pass: each grid step owns (block_b, T) full rows.

    Overhanging batch rows (ragged B) hold unspecified data, but all stats are
    row-local and Pallas masks the partial output-block write, so they are benign.
    """
    x = wav_ref[...]
    if mode == "std":
        xf = x.astype(jnp.float32)                               # f32 accumulation
        mean_sq = jnp.mean(xf * xf, axis=1, keepdims=True)
        # 1 / max(sqrt(m), 1e-8) == min(rsqrt(m), 1e8)  (rsqrt lives on the EUP slot)
        inv = jnp.minimum(lax.rsqrt(mean_sq), _CLIP_INV)
    else:  # "max" -- abs/max are exact in the input dtype
        amax = jnp.max(jnp.abs(x), axis=1, keepdims=True).astype(jnp.float32)
        inv = jnp.minimum(1.0 / amax, _CLIP_INV)
    # broadcast multiply in the input dtype (inv cast once per tile)
    out_ref[...] = (x * inv.astype(x.dtype)).astype(out_ref.dtype)


def _row_stat_kernel(wav_ref, stat_ref, *, mode, true_t, block_t, n_split, gj_inner,
                     ragged_t):
    """Two-pass, pass 1: partial per-row sum-of-squares (std) or abs-max (max).

    grid = (grid_b * n_split, gj_inner); axis 1 (T chunks) is the "arbitrary"
    reduction axis; the (1, block_b, 1) output block is resident across it.
    """
    p = pl.program_id(0)
    j = pl.program_id(1)

    @pl.when(j == 0)
    def _():
        stat_ref[...] = jnp.zeros_like(stat_ref)

    x = wav_ref[...]
    if ragged_t:
        # mask the ragged T tail: overhanging block columns are NOT guaranteed zero
        j_global = (p % n_split) * gj_inner + j
        col = j_global * block_t + lax.broadcasted_iota(jnp.int32, x.shape, 1)
        keep = col < true_t

    if mode == "std":
        xf = x.astype(jnp.float32)                               # f32 accumulation
        if ragged_t:
            xf = jnp.where(keep, xf, 0.0)
        part = jnp.sum(xf * xf, axis=1, keepdims=True)           # (block_b, 1)
        stat_ref[...] = stat_ref[...] + part[None]
    else:  # "max"
        a = jnp.abs(x)
        if ragged_t:
            a = jnp.where(keep, a, jnp.zeros_like(a))
        part = jnp.max(a, axis=1, keepdims=True).astype(jnp.float32)
        stat_ref[...] = jnp.maximum(stat_ref[...], part[None])


def _apply_scale_kernel(inv_ref, wav_ref, out_ref):
    """Two-pass, pass 2: pure broadcast multiply by the precomputed clipped inverse."""
    x = wav_ref[...]
    inv = inv_ref[...].astype(x.dtype)                           # (block_b, 1)
    out_ref[...] = (x * inv).astype(out_ref.dtype)


# ---------------------------------------------------------------------------
# pallas_call wrappers
# ---------------------------------------------------------------------------
def _single_pass(x, mode, block_b, budget):
    B, T = x.shape
    grid_b = -(-B // block_b)
    tile_io = block_b * T * x.dtype.itemsize
    tile_f32 = block_b * T * 4
    vmem_limit = int(min(max(4 * tile_io + 2 * tile_f32 + (8 << 20), 32 << 20),
                         budget["vmem_cap"]))

    kernel = functools.partial(_scale_rows_kernel, mode=mode)
    return pl.pallas_call(
        kernel,
        out_shape=jax.ShapeDtypeStruct((B, T), x.dtype),
        grid_spec=pltpu.PrefetchScalarGridSpec(
            num_scalar_prefetch=0,
            grid=(grid_b,),
            in_specs=[pl.BlockSpec((block_b, T), lambda i: (i, 0))],
            out_specs=pl.BlockSpec((block_b, T), lambda i: (i, 0)),
        ),
        compiler_params=pltpu.CompilerParams(
            dimension_semantics=("parallel",),
            vmem_limit_bytes=vmem_limit,
        ),
    )(x)


def _two_pass(x, mode, bb, bt, budget):
    B, T = x.shape
    grid_b = -(-B // bb)
    gj = -(-T // bt)
    # When the batch axis alone can't feed both TensorCores (grid_b == 1), split the
    # T reduction into 2 parallel partial stats (combined on a tiny array below).
    n_split = 2 if (grid_b == 1 and gj >= 4 and gj % 2 == 0) else 1
    gj_inner = gj // n_split
    ragged_t = (T % bt) != 0

    tile_io = bb * bt * x.dtype.itemsize
    tile_f32 = bb * bt * 4
    vmem_limit = int(min(max(4 * tile_io + 2 * tile_f32 + (8 << 20), 32 << 20),
                         budget["vmem_cap"]))

    stat_kernel = functools.partial(
        _row_stat_kernel, mode=mode, true_t=T, block_t=bt,
        n_split=n_split, gj_inner=gj_inner, ragged_t=ragged_t)

    partial_stats = pl.pallas_call(
        stat_kernel,
        out_shape=jax.ShapeDtypeStruct((n_split, B, 1), jnp.float32),
        grid_spec=pltpu.PrefetchScalarGridSpec(
            num_scalar_prefetch=0,
            grid=(grid_b * n_split, gj_inner),
            in_specs=[pl.BlockSpec(
                (bb, bt),
                lambda p, j: (p // n_split, (p % n_split) * gj_inner + j))],
            out_specs=pl.BlockSpec(
                (1, bb, 1), lambda p, j: (p % n_split, p // n_split, 0)),
        ),
        compiler_params=pltpu.CompilerParams(
            dimension_semantics=("parallel", "arbitrary"),
            vmem_limit_bytes=vmem_limit,
        ),
    )(x)

    # tiny (n_split, B, 1) combine + clipped inverse in plain XLA -> pass 2 is a
    # pure broadcast multiply
    if mode == "std":
        s = jnp.sum(partial_stats, axis=0)                       # (B, 1) sum of squares
        inv = jnp.minimum(lax.rsqrt(s * (1.0 / T)), _CLIP_INV)   # mean uses the true T
    else:  # "max"
        s = jnp.max(partial_stats, axis=0)
        inv = jnp.minimum(1.0 / s, _CLIP_INV)

    return pl.pallas_call(
        _apply_scale_kernel,
        out_shape=jax.ShapeDtypeStruct((B, T), x.dtype),
        grid_spec=pltpu.PrefetchScalarGridSpec(
            num_scalar_prefetch=0,
            grid=(grid_b, gj),
            in_specs=[
                pl.BlockSpec((bb, 1), lambda i, j: (i, 0)),
                pl.BlockSpec((bb, bt), lambda i, j: (i, j)),
            ],
            out_specs=pl.BlockSpec((bb, bt), lambda i, j: (i, j)),
        ),
        compiler_params=pltpu.CompilerParams(
            dimension_semantics=("parallel", "parallel"),
            vmem_limit_bytes=vmem_limit,
        ),
    )(inv, x)


@functools.partial(
    jax.jit, static_argnames=("normalize", "force_two_pass", "block_b", "block_t"))
def _normalize_pallas(wav, normalize="std", force_two_pass=False,
                      block_b=None, block_t=None):
    assert wav.ndim == 2, "Scale expects (B, T) waveforms"
    B, T = wav.shape
    itemsize = wav.dtype.itemsize
    budget = _chip_budget()
    row_align = _row_align(itemsize)

    # two-pass only when full-T rows (f32 working bytes, one row-aligned group)
    # blow the per-generation VMEM budget
    two_pass = force_two_pass or (min(B, row_align) * T * 4 > budget["full_row_tile"])

    if not two_pass:
        bb = block_b if block_b is not None else _pick_b_tiling(B, T, itemsize, budget)
        return _single_pass(wav, normalize, bb, budget)

    bb = block_b if block_b is not None else (B if B <= row_align else row_align)
    bt = block_t if block_t is not None else _pick_t_tiling(T, bb, budget)
    return _two_pass(wav, normalize, bb, bt, budget)


def scale_forward(wav, y=None, normalize="std", training=False):
    """Pallas equivalent of Scale.forward (eval mode)."""
    if normalize:
        if normalize == "std":
            wav = _normalize_pallas(wav, normalize="std")
        elif normalize == "max":
            wav = _normalize_pallas(wav, normalize="max")
        elif normalize == "none" or normalize is False:
            pass
        else:
            raise NotImplementedError()
    if training:
        # TODO(synk): training-time random gain (scipy truncnorm(-log3, log3) per row,
        # host-side RNG) is not part of the deterministic eval forward and is not
        # reproduced in the kernel.
        pass
    return (wav, y)


# ---------------------------------------------------------------------------
# Self-test
# ---------------------------------------------------------------------------
if __name__ == "__main__":
    key = jax.random.PRNGKey(0)
    B, T = 4, 256
    wav = jax.random.normal(key, (B, T), dtype=jnp.float32) * 3.0 + 0.5

    def ref_std(x):
        return x / jnp.maximum(jnp.sqrt(jnp.mean(x * x, axis=1, keepdims=True)), 1e-8)

    def ref_max(x):
        return x / jnp.maximum(jnp.max(jnp.abs(x), axis=1, keepdims=True), 1e-8)

    # --- single-pass path (full rows, grid over B) ---
    out, _ = scale_forward(wav, y=None, normalize="std", training=False)
    out = jax.block_until_ready(out)
    assert out.shape == (B, T)
    assert jnp.allclose(out, ref_std(wav), atol=1e-5, rtol=1e-4), "std mismatch"

    out_max, _ = scale_forward(wav, normalize="max")
    out_max = jax.block_until_ready(out_max)
    assert jnp.allclose(out_max, ref_max(wav), atol=1e-5, rtol=1e-4), "max mismatch"

    # --- two-pass path, ragged B and ragged T (in-kernel tail masking, no padding) ---
    wav2 = jax.random.normal(jax.random.PRNGKey(1), (10, 1000), jnp.float32) * 2.0 - 0.3
    out2 = _normalize_pallas(wav2, normalize="std", force_two_pass=True,
                             block_b=8, block_t=256)
    out2 = jax.block_until_ready(out2)
    assert jnp.allclose(out2, ref_std(wav2), atol=1e-5, rtol=1e-4), "two-pass std mismatch"

    out2m = _normalize_pallas(wav2, normalize="max", force_two_pass=True,
                              block_b=8, block_t=256)
    out2m = jax.block_until_ready(out2m)
    assert jnp.allclose(out2m, ref_max(wav2), atol=1e-5, rtol=1e-4), "two-pass max mismatch"

    # --- small-batch two-pass: grid_b == 1 -> T reduction split across 2 parallel
    #     partial stats (both TensorCores busy), plus ragged-T masking ---
    wav3 = jax.random.normal(jax.random.PRNGKey(2), (4, 1000), jnp.float32) * 1.7 + 0.1
    out3 = _normalize_pallas(wav3, normalize="std", force_two_pass=True, block_t=256)
    out3 = jax.block_until_ready(out3)
    assert jnp.allclose(out3, ref_std(wav3), atol=1e-5, rtol=1e-4), "split-stat std mismatch"

    out3m = _normalize_pallas(wav3, normalize="max", force_two_pass=True, block_t=256)
    out3m = jax.block_until_ready(out3m)
    assert jnp.allclose(out3m, ref_max(wav3), atol=1e-5, rtol=1e-4), "split-stat max mismatch"

    # --- bf16 I/O (f32 stat accumulation, scale multiply in bf16) ---
    wav_bf16 = wav.astype(jnp.bfloat16)
    out_bf, _ = scale_forward(wav_bf16, normalize="std")
    out_bf = jax.block_until_ready(out_bf)
    ref_bf = ref_std(wav_bf16.astype(jnp.float32))
    assert jnp.allclose(out_bf.astype(jnp.float32), ref_bf, atol=2e-2, rtol=2e-2), \
        "bf16 std mismatch"

    print("KERNEL_OK")
</pallas_src>

<mosaic_0001>
module attributes {stable_mosaic.version = 11 : i64} {
  func.func @_scale_rows_kernel(%arg0: i32, %arg1: memref<4x256xf32, #tpu.memory_space<vmem>>, %arg2: memref<4x256xf32, #tpu.memory_space<vmem>>) attributes {dimension_semantics = [#tpu.dimension_semantics<parallel>], iteration_bounds = array<i64: 1>, scalar_prefetch = 0 : i64, scratch_operands = 0 : i64, tpu.core_type = #tpu.core_type<tc>, window_params = [{transform_indices = @transform_0, window_bounds = array<i64: 4, 256>}, {transform_indices = @transform_1, window_bounds = array<i64: 4, 256>}]} {
    %c0 = arith.constant 0 : index
    %c0_0 = arith.constant 0 : index
    %0 = vector.load %arg1[%c0, %c0_0] : memref<4x256xf32, #tpu.memory_space<vmem>>, vector<4x256xf32>
    %1 = arith.mulf %0, %0 : vector<4x256xf32>
    %cst = arith.constant dense<0.000000e+00> : vector<4xf32>
    %2 = vector.multi_reduction <add>, %1, %cst [1] : vector<4x256xf32> to vector<4xf32>
    %3 = vector.shape_cast %2 : vector<4xf32> to vector<4x1xf32>
    %cst_1 = arith.constant 2.560000e+02 : f32
    %4 = vector.broadcast %cst_1 : f32 to vector<4x1xf32>
    %5 = arith.divf %3, %4 : vector<4x1xf32>
    %6 = math.rsqrt %5 : vector<4x1xf32>
    %cst_2 = arith.constant 1.000000e+08 : f32
    %7 = vector.broadcast %cst_2 : f32 to vector<4x1xf32>
    %8 = arith.minimumf %6, %7 : vector<4x1xf32>
    %9 = vector.broadcast %8 : vector<4x1xf32> to vector<4x256xf32>
    %10 = arith.mulf %0, %9 : vector<4x256xf32>
    %c0_3 = arith.constant 0 : index
    %c0_4 = arith.constant 0 : index
    %11 = vector.load %arg2[%c0_3, %c0_4] : memref<4x256xf32, #tpu.memory_space<vmem>>, vector<4x256xf32>
    tpu.vector_store %arg2[%c0_3, %c0_4], %10 {strides = array<i32>} : memref<4x256xf32, #tpu.memory_space<vmem>>, vector<4x256xf32>,
    return
  }
  func.func @transform_0(%arg0: i32) -> (i32, i32) {
    %c0_i32 = arith.constant 0 : i32
    %c0_i32_0 = arith.constant 0 : i32
    return %arg0, %c0_i32 : i32, i32
  }
  func.func @transform_1(%arg0: i32) -> (i32, i32) {
    %c0_i32 = arith.constant 0 : i32
    %c0_i32_0 = arith.constant 0 : i32
    return %arg0, %c0_i32 : i32, i32
  }
}

</mosaic_0001>

<llo_original>
// kernel: _normalize_pallas.1
$region0: #{_normalize_pallas.1}
  #allocation0 [shape = 'u32[]', space=smem, size = 0x4, offset = 0x4, fixed_abs, tag = 'smem constant byte address 0x4 - core index']
  #allocation1 [shape = 'u32[144,128]{1,0:T(1,128)}', space=vmem, size = 0x12000, scoped, tag = 'internal scratch']
  %s0 = inlined_call_operand.hbm [shape: f32[4,256], index: 0, kind: input, shape index: {}]
  %s1 = inlined_call_operand.hbm [shape: f32[4,256], index: 1, kind: output, shape index: {}]
  %s2 = sld [smem:[#allocation0]]
  $region18: #{_normalize_pallas.1} parent=0
    _
  %s4 = ssub.s32 1, %s2
  %s5 = scalar_select 0, %s4, %s2
  $region1: #{_normalize_pallas.1} parent=0
    #allocation2 [shape = 'u8[4096]{0}', space=vmem, size = 0x1000, scoped, tag = 'input window, operand 0, single buffered']
    #allocation3 [shape = 's32[1]{0}', space=sflag, size = 0x4, scoped, tag = 'scoped memory for _normalize_pallas.1']
    #allocation4 [shape = 's32[1]{0}', space=sflag, size = 0x4, scoped, tag = 'scoped memory for _normalize_pallas.1']
    #allocation5 [shape = 'u8[4096]{0}', space=vmem, size = 0x1000, scoped, tag = 'output window, operand 0, single buffered']
    %6 = vsyncpa [#allocation3], 0
    %7 = vsyncpa [#allocation4], 0
    // Predicated region
    $region2: #{_normalize_pallas.1} parent=1 // pred_check
      _
    $region3: #{_normalize_pallas.1} parent=1 // pred_check_branch
      %9 = sbr.rel (0) target = $region5
    $region4: #{_normalize_pallas.1} parent=1 // pred_region
      %s11 = ssub.s32 128, 128
      %12 = vsyncadd [#allocation3], %s11
      %s14 = sshll.u32 [#allocation2], 4
      %s15 = int_to_ptr.vmem [resolvable:$true] %s14
      %17 = dma.hbm_to_vmem [thread:$0]  %s0, 128, %s15, [#allocation3]
    $region5: #{_normalize_pallas.1} parent=1 // pred_fallthru
      _
    // Predicated region
    $region6: #{_normalize_pallas.1} parent=1 // pred_check
      _
    $region7: #{_normalize_pallas.1} parent=1 // pred_check_branch
      %19 = sbr.rel (0) target = $region9
    $region8: #{_normalize_pallas.1} parent=1 // pred_region
      %20 = dma.done [#allocation3], 128
    $region9: #{_normalize_pallas.1} parent=1 // pred_fallthru
      _
    %v21 = vld [vmem:[#allocation2] sm:$0xff]
    %v22 = vmul.f32 %v21, %v21
    %v24 = vcombine.high %v22, %v22
    %vm26 = vcmask 1043456
    %v27 = vsel %vm26, %v22, 0.0
    %v28 = vsel %vm26, %v24, 0.0
    %v29 = vadd.f32 %v27, %v28
    %30 = vadd.xlane.f32.xlu0 %v29
    %v31 = vpop.xlane.xlu0 %30
    %v32 = vrcp.pop 256.0
    %v33 = vmul.f32 %v31, %v32
    %v34 = vrsqrt.pop %v33
    %v35 = vmin.f32 %v34, 1e+08
    %v38 = vunpack.c.l.s4 839922192
    %v39 = vunpack.c.0.s8 %v38
    %v40 = vlaneseq
    %v41 = vshrl.u32 %v40, 7
    %v42 = vsub.s32 %v39, %v41
    %v43 = vrot.slane %v35, %v42
    %v45 = vmul.f32 %v21, %v43
    %46 = vst [vmem:[#allocation5] sm:$0xff] %v45
    // Predicated region
    $region10: #{_normalize_pallas.1} parent=1 // pred_check
      _
    $region11: #{_normalize_pallas.1} parent=1 // pred_check_branch
      %48 = sbr.rel (0) target = $region13
    $region12: #{_normalize_pallas.1} parent=1 // pred_region
      %s50 = ssub.s32 128, 128
      %51 = vsyncadd [#allocation4], %s50
      %s53 = sshll.u32 [#allocation5], 4
      %s54 = int_to_ptr.vmem [resolvable:$true] %s53
      %56 = dma.vmem_to_hbm [thread:$0]  %s54, 128, %s1, [#allocation4]
    $region13: #{_normalize_pallas.1} parent=1 // pred_fallthru
      _
    // Predicated region
    $region14: #{_normalize_pallas.1} parent=1 // pred_check
      _
    $region15: #{_normalize_pallas.1} parent=1 // pred_check_branch
      %58 = sbr.rel (0) target = $region17
    $region16: #{_normalize_pallas.1} parent=1 // pred_region
      %59 = dma.done [#allocation4], 128
    $region17: #{_normalize_pallas.1} parent=1 // pred_fallthru
      _
    %60 = vsyncpa [#allocation3], 1
    %61 = vsyncpa [#allocation4], 1

</llo_original>
